<compile_context>
chip_gen: v7x
topology: tpu7x:2x2x1
jax: 0.10.0
libtpu: 0.0.40
codegen_flags: <defaults>
</compile_context>

<pallas_src>
import math

import jax
import jax.numpy as jnp
from jax.experimental import pallas as pl
from jax.experimental.pallas import tpu as pltpu

# Small, TPU-friendly shapes consistent with Net(dw, dwpe, dc, k)
DW = 32
K = 4
DIN = DW * K        # 128  (= dw * k, lane dim of x and contraction dim of l1)
DC = 256            # hidden width
NCLASS = 10
NPAD = 128          # classes zero-padded to a full lane group
N = 8               # window rows per sample (the dim reduced by torch.max(x, 0))
B = 64              # total samples in the batch
BT = B              # samples per grid step: whole batch in ONE step -> grid=(1,)


def net_kernel(x_ref, w1_ref, b1_ref, w2_ref, out_ref):
    # x_ref : (N*BT, DIN) bf16  window-row-major: rows j*BT..(j+1)*BT-1 hold window
    #                           row j of all BT samples
    # w1_ref: (DIN, DC)   bf16
    # b1_ref: (1, DC)     f32
    # w2_ref: (DC, NPAD)  bf16  classifier (transposed), classes zero-padded to 128
    # out_ref: (BT, NPAD) f32   lane-dense log-prob slab (lanes 0..9 valid)

    # l1: one (N*BT, DIN) @ (DIN, DC) MXU matmul, f32 accumulation.
    h = jnp.dot(x_ref[...], w1_ref[...], preferred_element_type=jnp.float32)
    h = h + b1_ref[...]                    # broadcast bias over all rows
    t = jnp.tanh(h)                        # f32 elementwise (v5e-safe)

    # Per-sample max over the N window rows: because the block is window-row-major,
    # this is N-1 sublane-aligned elementwise maximums of (BT, DC) slabs (pure VPU,
    # no 3-D reshapes or cross-lane reductions).
    m = t[0:BT, :]
    for j in range(1, N):
        m = jnp.maximum(m, t[j * BT:(j + 1) * BT, :])          # (BT, DC)

    # Classifier (no bias): bf16 x bf16 MXU with f32 accumulation, lane-dense
    # padded output (BT, 128).
    logits = jnp.dot(m.astype(jnp.bfloat16), w2_ref[...],
                     preferred_element_type=jnp.float32)       # (BT, NPAD)

    # Masked, numerically-stable log_softmax over the first NCLASS lanes.
    lane = jax.lax.broadcasted_iota(jnp.int32, logits.shape, 1)
    valid = lane < NCLASS
    masked = jnp.where(valid, logits, jnp.float32(-1e30))
    mx = jnp.max(masked, axis=-1, keepdims=True)
    z = masked - mx
    lse = jnp.log(jnp.sum(jnp.exp(z), axis=-1, keepdims=True))
    out_ref[...] = jnp.where(valid, z - lse, 0.0)


def net_forward(x, w1, b1, w2p):
    """x: (B, N, DIN) bf16 batch of independent samples -> (B, NCLASS) f32 log-probs."""
    batch = x.shape[0]
    assert batch == BT, "this build handles the whole batch in one grid step"
    # Window-row-major fold done in the wrapper (free layout change, keeps the
    # kernel reshape-free).
    # TODO(synk): fold this transpose into the producer of x to avoid one extra
    # HBM round-trip of x at large batch.
    x2d = jnp.transpose(x, (1, 0, 2)).reshape(N * batch, DIN)   # (N*B, DIN)

    out = pl.pallas_call(
        net_kernel,
        out_shape=jax.ShapeDtypeStruct((batch, NPAD), jnp.float32),
        grid_spec=pltpu.PrefetchScalarGridSpec(
            num_scalar_prefetch=0,
            grid=(batch // BT,),                                # = (1,)
            in_specs=[
                pl.BlockSpec((N * BT, DIN), lambda i: (i, 0)),  # x block
                # weights: constant block index -> DMA'd exactly once
                pl.BlockSpec((DIN, DC), lambda i: (0, 0)),
                pl.BlockSpec((1, DC), lambda i: (0, 0)),
                pl.BlockSpec((DC, NPAD), lambda i: (0, 0)),
            ],
            out_specs=pl.BlockSpec((BT, NPAD), lambda i: (i, 0)),
        ),
        compiler_params=pltpu.CompilerParams(
            dimension_semantics=("arbitrary",)),
    )(x2d, w1, b1, w2p)
    return out[:, :NCLASS]


def init_params(key):
    k1, k2, k3 = jax.random.split(key, 3)
    # nn.Linear(DIN, DC): uniform(-1/sqrt(DIN), 1/sqrt(DIN)); weights stored bf16.
    bound1 = 1.0 / math.sqrt(DIN)
    w1 = jax.random.uniform(k1, (DIN, DC), jnp.float32,
                            -bound1, bound1).astype(jnp.bfloat16)
    b1 = jax.random.uniform(k2, (1, DC), jnp.float32, -bound1, bound1)
    # wClass = rand(10, dc) * 2r  (the out-of-place .add(-r) in the module is a no-op)
    r = math.sqrt(6.0 / (10 + DC))
    w_class = jax.random.uniform(k3, (NCLASS, DC), jnp.float32, 0.0, 1.0) * (2.0 * r)
    # l2(x) = x @ wClass.T -> store transposed, zero-pad classes to 128 lanes, bf16.
    w2p = (jnp.zeros((DC, NPAD), jnp.float32)
           .at[:, :NCLASS].set(w_class.T)).astype(jnp.bfloat16)
    return w1, b1, w2p


def reference(x, w1, b1, w2p):
    """Pure-JAX reference with the same bf16 storage/rounding points as the kernel."""
    xf = x.astype(jnp.float32)
    w1f = w1.astype(jnp.float32)
    h = jnp.tanh(
        jnp.einsum("bnd,dc->bnc", xf, w1f,
                   precision=jax.lax.Precision.HIGHEST) + b1)
    m = jnp.max(h, axis=1)                                     # (B, DC) f32
    m_bf = m.astype(jnp.bfloat16).astype(jnp.float32)          # same rounding as kernel
    w2f = w2p[:, :NCLASS].astype(jnp.float32)
    logits = jnp.dot(m_bf, w2f,
                     precision=jax.lax.Precision.HIGHEST)      # (B, 10)
    return jax.nn.log_softmax(logits, axis=-1)


if __name__ == "__main__":
    key = jax.random.PRNGKey(0)
    kx, kp = jax.random.split(key)
    x = jax.random.normal(kx, (B, N, DIN), jnp.float32).astype(jnp.bfloat16)
    w1, b1, w2p = init_params(kp)

    out = net_forward(x, w1, b1, w2p)
    out = jax.block_until_ready(out)

    ref = reference(x, w1, b1, w2p)
    assert out.shape == (B, NCLASS), out.shape
    # Tolerance slightly loosened vs pure-f32 path to absorb bf16 rounding of m/w2.
    assert jnp.allclose(out, ref, atol=2e-3, rtol=2e-3), (out, ref)
    print("KERNEL_OK")
</pallas_src>

<mosaic_0001>
module attributes {stable_mosaic.version = 11 : i64} {
  func.func @net_kernel(%arg0: i32, %arg1: memref<512x128xbf16, #tpu.memory_space<vmem>>, %arg2: memref<128x256xbf16, #tpu.memory_space<vmem>>, %arg3: memref<1x256xf32, #tpu.memory_space<vmem>>, %arg4: memref<256x128xbf16, #tpu.memory_space<vmem>>, %arg5: memref<64x128xf32, #tpu.memory_space<vmem>>) attributes {dimension_semantics = [#tpu.dimension_semantics<arbitrary>], iteration_bounds = array<i64: 1>, scalar_prefetch = 0 : i64, scratch_operands = 0 : i64, tpu.core_type = #tpu.core_type<tc>, window_params = [{transform_indices = @transform_0, window_bounds = array<i64: 512, 128>}, {pipeline_mode = #tpu.pipeline_mode<synchronous>, transform_indices = @transform_1, window_bounds = array<i64: 128, 256>}, {pipeline_mode = #tpu.pipeline_mode<synchronous>, transform_indices = @transform_2, window_bounds = array<i64: 1, 256>}, {pipeline_mode = #tpu.pipeline_mode<synchronous>, transform_indices = @transform_3, window_bounds = array<i64: 256, 128>}, {transform_indices = @transform_4, window_bounds = array<i64: 64, 128>}]} {
    %c0 = arith.constant 0 : index
    %c0_0 = arith.constant 0 : index
    %0 = vector.load %arg1[%c0, %c0_0] : memref<512x128xbf16, #tpu.memory_space<vmem>>, vector<512x128xbf16>
    %c0_1 = arith.constant 0 : index
    %c0_2 = arith.constant 0 : index
    %1 = vector.load %arg2[%c0_1, %c0_2] : memref<128x256xbf16, #tpu.memory_space<vmem>>, vector<128x256xbf16>
    %cst = arith.constant dense<0.000000e+00> : vector<512x256xf32>
    %2 = tpu.matmul %0, %1, %cst {dimension_numbers = #tpu.dot_dimension_numbers<[1], [0], [0], [1], [0, 0, 1, 1], [], []>} : vector<512x128xbf16>, vector<128x256xbf16>, vector<512x256xf32> -> vector<512x256xf32>
    %c0_3 = arith.constant 0 : index
    %c0_4 = arith.constant 0 : index
    %3 = vector.load %arg3[%c0_3, %c0_4] : memref<1x256xf32, #tpu.memory_space<vmem>>, vector<1x256xf32>
    %4 = vector.broadcast %3 : vector<1x256xf32> to vector<512x256xf32>
    %5 = arith.addf %2, %4 : vector<512x256xf32>
    %6 = math.tanh %5 : vector<512x256xf32>
    %7 = vector.extract_strided_slice %6 {offsets = [0, 0], sizes = [64, 256], strides = [1, 1]} : vector<512x256xf32> to vector<64x256xf32>
    %8 = vector.extract_strided_slice %6 {offsets = [64, 0], sizes = [64, 256], strides = [1, 1]} : vector<512x256xf32> to vector<64x256xf32>
    %9 = arith.maximumf %7, %8 : vector<64x256xf32>
    %10 = vector.extract_strided_slice %6 {offsets = [128, 0], sizes = [64, 256], strides = [1, 1]} : vector<512x256xf32> to vector<64x256xf32>
    %11 = arith.maximumf %9, %10 : vector<64x256xf32>
    %12 = vector.extract_strided_slice %6 {offsets = [192, 0], sizes = [64, 256], strides = [1, 1]} : vector<512x256xf32> to vector<64x256xf32>
    %13 = arith.maximumf %11, %12 : vector<64x256xf32>
    %14 = vector.extract_strided_slice %6 {offsets = [256, 0], sizes = [64, 256], strides = [1, 1]} : vector<512x256xf32> to vector<64x256xf32>
    %15 = arith.maximumf %13, %14 : vector<64x256xf32>
    %16 = vector.extract_strided_slice %6 {offsets = [320, 0], sizes = [64, 256], strides = [1, 1]} : vector<512x256xf32> to vector<64x256xf32>
    %17 = arith.maximumf %15, %16 : vector<64x256xf32>
    %18 = vector.extract_strided_slice %6 {offsets = [384, 0], sizes = [64, 256], strides = [1, 1]} : vector<512x256xf32> to vector<64x256xf32>
    %19 = arith.maximumf %17, %18 : vector<64x256xf32>
    %20 = vector.extract_strided_slice %6 {offsets = [448, 0], sizes = [64, 256], strides = [1, 1]} : vector<512x256xf32> to vector<64x256xf32>
    %21 = arith.maximumf %19, %20 : vector<64x256xf32>
    %22 = arith.truncf %21 : vector<64x256xf32> to vector<64x256xbf16>
    %c0_5 = arith.constant 0 : index
    %c0_6 = arith.constant 0 : index
    %23 = vector.load %arg4[%c0_5, %c0_6] : memref<256x128xbf16, #tpu.memory_space<vmem>>, vector<256x128xbf16>
    %cst_7 = arith.constant dense<0.000000e+00> : vector<64x128xf32>
    %24 = tpu.matmul %22, %23, %cst_7 {dimension_numbers = #tpu.dot_dimension_numbers<[1], [0], [0], [1], [0, 0, 1, 1], [], []>} : vector<64x256xbf16>, vector<256x128xbf16>, vector<64x128xf32> -> vector<64x128xf32>
    %25 = tpu.iota {dimensions = array<i32: 1>} : vector<64x128xi32>
    %c10_i32 = arith.constant 10 : i32
    %26 = vector.broadcast %c10_i32 : i32 to vector<64x128xi32>
    %27 = arith.cmpi slt, %25, %26 : vector<64x128xi32>
    %cst_8 = arith.constant -1.000000e+30 : f32
    %28 = vector.broadcast %cst_8 : f32 to vector<64x128xf32>
    %29 = arith.select %27, %24, %28 : vector<64x128xi1>, vector<64x128xf32>
    %cst_9 = arith.constant dense<0xFF800000> : vector<64xf32>
    %30 = vector.multi_reduction <maximumf>, %29, %cst_9 [1] : vector<64x128xf32> to vector<64xf32>
    %31 = vector.shape_cast %30 : vector<64xf32> to vector<64x1xf32>
    %32 = vector.broadcast %31 : vector<64x1xf32> to vector<64x128xf32>
    %33 = arith.subf %29, %32 : vector<64x128xf32>
    %34 = math.exp %33 : vector<64x128xf32>
    %cst_10 = arith.constant dense<0.000000e+00> : vector<64xf32>
    %35 = vector.multi_reduction <add>, %34, %cst_10 [1] : vector<64x128xf32> to vector<64xf32>
    %36 = vector.shape_cast %35 : vector<64xf32> to vector<64x1xf32>
    %37 = math.log %36 : vector<64x1xf32>
    %38 = vector.broadcast %37 : vector<64x1xf32> to vector<64x128xf32>
    %39 = arith.subf %33, %38 : vector<64x128xf32>
    %cst_11 = arith.constant 0.000000e+00 : f32
    %40 = vector.broadcast %cst_11 : f32 to vector<64x128xf32>
    %41 = arith.select %27, %39, %40 : vector<64x128xi1>, vector<64x128xf32>
    %c0_12 = arith.constant 0 : index
    %c0_13 = arith.constant 0 : index
    %42 = vector.load %arg5[%c0_12, %c0_13] : memref<64x128xf32, #tpu.memory_space<vmem>>, vector<64x128xf32>
    tpu.vector_store %arg5[%c0_12, %c0_13], %41 {strides = array<i32>} : memref<64x128xf32, #tpu.memory_space<vmem>>, vector<64x128xf32>,
    return
  }
  func.func @transform_0(%arg0: i32) -> (i32, i32) {
    %c0_i32 = arith.constant 0 : i32
    %c0_i32_0 = arith.constant 0 : i32
    return %arg0, %c0_i32 : i32, i32
  }
  func.func @transform_1(%arg0: i32) -> (i32, i32) {
    %c0_i32 = arith.constant 0 : i32
    %c0_i32_0 = arith.constant 0 : i32
    %c0_i32_1 = arith.constant 0 : i32
    return %c0_i32, %c0_i32_0 : i32, i32
  }
  func.func @transform_2(%arg0: i32) -> (i32, i32) {
    %c0_i32 = arith.constant 0 : i32
    %c0_i32_0 = arith.constant 0 : i32
    %c0_i32_1 = arith.constant 0 : i32
    return %c0_i32, %c0_i32_0 : i32, i32
  }
  func.func @transform_3(%arg0: i32) -> (i32, i32) {
    %c0_i32 = arith.constant 0 : i32
    %c0_i32_0 = arith.constant 0 : i32
    %c0_i32_1 = arith.constant 0 : i32
    return %c0_i32, %c0_i32_0 : i32, i32
  }
  func.func @transform_4(%arg0: i32) -> (i32, i32) {
    %c0_i32 = arith.constant 0 : i32
    %c0_i32_0 = arith.constant 0 : i32
    return %arg0, %c0_i32 : i32, i32
  }
}

</mosaic_0001>

<llo_original>
// kernel: tpu_custom_call.1
$region0: #{tpu_custom_call.1}
  #allocation0 [shape = 'u32[]', space=smem, size = 0x4, offset = 0x4, fixed_abs, tag = 'smem constant byte address 0x4 - core index']
  #allocation1 [shape = 'u32[144,128]{1,0:T(1,128)}', space=vmem, size = 0x12000, scoped, tag = 'internal scratch']
  %s0 = inlined_call_operand.hbm [shape: bf16[512,128], index: 0, kind: input, shape index: {}]
  %s1 = inlined_call_operand.hbm [shape: bf16[128,256], index: 1, kind: input, shape index: {}]
  %s2 = inlined_call_operand.vmem [shape: f32[1,256], index: 2, kind: input, shape index: {}]
  %s3 = inlined_call_operand.hbm [shape: bf16[256,128], index: 3, kind: input, shape index: {}]
  %s4 = inlined_call_operand.hbm [shape: f32[64,128], index: 4, kind: output, shape index: {}]
  %s5 = sld [smem:[#allocation0]]
  $region38: #{tpu_custom_call.1} parent=0
    _
  %s7 = ssub.s32 1, %s5
  %s8 = scalar_select 0, %s7, %s5
  $region1: #{tpu_custom_call.1} parent=0
    #allocation2 [shape = 'u8[131072]{0}', space=vmem, size = 0x20000, scoped, tag = 'input window, operand 0, single buffered']
    #allocation3 [shape = 's32[1]{0}', space=sflag, size = 0x4, scoped, tag = 'scoped memory for tpu_custom_call.1']
    #allocation4 [shape = 's32[1]{0}', space=sflag, size = 0x4, scoped, tag = 'scoped memory for tpu_custom_call.1']
    #allocation5 [shape = 'u8[65536]{0}', space=vmem, size = 0x10000, scoped, tag = 'input window, operand 1, single buffered']
    #allocation6 [shape = 's32[1]{0}', space=sflag, size = 0x4, scoped, tag = 'scoped memory for tpu_custom_call.1']
    #allocation7 [shape = 'u8[65536]{0}', space=vmem, size = 0x10000, scoped, tag = 'input window, operand 3, single buffered']
    #allocation8 [shape = 'u8[32768]{0}', space=vmem, size = 0x8000, scoped, tag = 'output window, operand 0, single buffered']
    %9 = vsyncpa [#allocation3], 0
    %10 = vsyncpa [#allocation6], 0
    %11 = vsyncpa [#allocation4], 0
    // Predicated region
    $region2: #{tpu_custom_call.1} parent=1 // pred_check
      _
    $region3: #{tpu_custom_call.1} parent=1 // pred_check_branch
      %13 = sbr.rel (0) target = $region5
    $region4: #{tpu_custom_call.1} parent=1 // pred_region
      %s15 = ssub.s32 4096, 4096
      %16 = vsyncadd [#allocation3], %s15
      %s17 = sshll.u32 [#allocation2], 4
      %s18 = int_to_ptr.vmem [resolvable:$true] %s17
      %23 = dma.hbm_to_vmem [thread:$0]  %s0, 4096, %s18, [#allocation3], 64, 64, 4
    $region5: #{tpu_custom_call.1} parent=1 // pred_fallthru
      _
    // Predicated region
    $region6: #{tpu_custom_call.1} parent=1 // pred_check
      _
    $region7: #{tpu_custom_call.1} parent=1 // pred_check_branch
      %25 = sbr.rel (0) target = $region9
    $region8: #{tpu_custom_call.1} parent=1 // pred_region
      %s27 = ssub.s32 2048, 2048
      %28 = vsyncadd [#allocation6], %s27
      %s29 = sshll.u32 [#allocation5], 4
      %s30 = int_to_ptr.vmem [resolvable:$true] %s29
      %35 = dma.hbm_to_vmem [thread:$0]  %s1, 2048, %s30, [#allocation6], 128, 128, 8
    $region9: #{tpu_custom_call.1} parent=1 // pred_fallthru
      _
    // Predicated region
    $region10: #{tpu_custom_call.1} parent=1 // pred_check
      _
    $region11: #{tpu_custom_call.1} parent=1 // pred_check_branch
      %37 = sbr.rel (0) target = $region13
    $region12: #{tpu_custom_call.1} parent=1 // pred_region
      _
    $region13: #{tpu_custom_call.1} parent=1 // pred_fallthru
      _
    // Predicated region
    $region14: #{tpu_custom_call.1} parent=1 // pred_check
      _
    $region15: #{tpu_custom_call.1} parent=1 // pred_check_branch
      %39 = sbr.rel (0) target = $region17
    $region16: #{tpu_custom_call.1} parent=1 // pred_region
      %s41 = ssub.s32 2048, 2048
      %42 = vsyncadd [#allocation6], %s41
      %s43 = sshll.u32 [#allocation7], 4
      %s44 = int_to_ptr.vmem [resolvable:$true] %s43
      %49 = dma.hbm_to_vmem [thread:$0]  %s3, 2048, %s44, [#allocation6], 64, 64, 4
    $region17: #{tpu_custom_call.1} parent=1 // pred_fallthru
      _
    // Predicated region
    $region18: #{tpu_custom_call.1} parent=1 // pred_check
      _
    $region19: #{tpu_custom_call.1} parent=1 // pred_check_branch
      %51 = sbr.rel (0) target = $region21
    $region20: #{tpu_custom_call.1} parent=1 // pred_region
      %52 = dma.done [#allocation3], 4096
    $region21: #{tpu_custom_call.1} parent=1 // pred_fallthru
      _
    // Predicated region
    $region22: #{tpu_custom_call.1} parent=1 // pred_check
      _
    $region23: #{tpu_custom_call.1} parent=1 // pred_check_branch
      %54 = sbr.rel (0) target = $region25
    $region24: #{tpu_custom_call.1} parent=1 // pred_region
      %55 = dma.done [#allocation6], 2048
    $region25: #{tpu_custom_call.1} parent=1 // pred_fallthru
      _
    // Predicated region
    $region26: #{tpu_custom_call.1} parent=1 // pred_check
      _
    $region27: #{tpu_custom_call.1} parent=1 // pred_check_branch
      %57 = sbr.rel (0) target = $region29
    $region28: #{tpu_custom_call.1} parent=1 // pred_region
      %58 = dma.done [#allocation6], 2048
    $region29: #{tpu_custom_call.1} parent=1 // pred_fallthru
      _
    %v60 = vld [vmem:[#allocation2] sm:$0xf]
    %v61 = vld [vmem:[#allocation2 + $0x4] sm:$0xf]
    %v62 = vld [vmem:[#allocation2 + $0x8] sm:$0xf]
    %v63 = vld [vmem:[#allocation2 + $0xc] sm:$0xf]
    %v64 = vld [vmem:[#allocation2 + $0x10] sm:$0xf]
    %v65 = vld [vmem:[#allocation2 + $0x14] sm:$0xf]
    %v66 = vld [vmem:[#allocation2 + $0x18] sm:$0xf]
    %v67 = vld [vmem:[#allocation2 + $0x1c] sm:$0xf]
    %v68 = vld [vmem:[#allocation2 + $0x20] sm:$0xf]
    %v69 = vld [vmem:[#allocation2 + $0x24] sm:$0xf]
    %v70 = vld [vmem:[#allocation2 + $0x28] sm:$0xf]
    %v71 = vld [vmem:[#allocation2 + $0x2c] sm:$0xf]
    %v72 = vld [vmem:[#allocation2 + $0x30] sm:$0xf]
    %v73 = vld [vmem:[#allocation2 + $0x34] sm:$0xf]
    %v74 = vld [vmem:[#allocation2 + $0x38] sm:$0xf]
    %v75 = vld [vmem:[#allocation2 + $0x3c] sm:$0xf]
    %v76 = vld [vmem:[#allocation2 + $0x40] sm:$0xf]
    %v77 = vld [vmem:[#allocation2 + $0x44] sm:$0xf]
    %v78 = vld [vmem:[#allocation2 + $0x48] sm:$0xf]
    %v79 = vld [vmem:[#allocation2 + $0x4c] sm:$0xf]
    %v80 = vld [vmem:[#allocation2 + $0x50] sm:$0xf]
    %v81 = vld [vmem:[#allocation2 + $0x54] sm:$0xf]
    %v82 = vld [vmem:[#allocation2 + $0x58] sm:$0xf]
    %v83 = vld [vmem:[#allocation2 + $0x5c] sm:$0xf]
    %v84 = vld [vmem:[#allocation2 + $0x60] sm:$0xf]
    %v85 = vld [vmem:[#allocation2 + $0x64] sm:$0xf]
    %v86 = vld [vmem:[#allocation2 + $0x68] sm:$0xf]
    %v87 = vld [vmem:[#allocation2 + $0x6c] sm:$0xf]
    %v88 = vld [vmem:[#allocation2 + $0x70] sm:$0xf]
    %v89 = vld [vmem:[#allocation2 + $0x74] sm:$0xf]
    %v90 = vld [vmem:[#allocation2 + $0x78] sm:$0xf]
    %v91 = vld [vmem:[#allocation2 + $0x7c] sm:$0xf]
    %v92 = vld [vmem:[#allocation2 + $0x80] sm:$0xf]
    %v93 = vld [vmem:[#allocation2 + $0x84] sm:$0xf]
    %v94 = vld [vmem:[#allocation2 + $0x88] sm:$0xf]
    %v95 = vld [vmem:[#allocation2 + $0x8c] sm:$0xf]
    %v96 = vld [vmem:[#allocation2 + $0x90] sm:$0xf]
    %v97 = vld [vmem:[#allocation2 + $0x94] sm:$0xf]
    %v98 = vld [vmem:[#allocation2 + $0x98] sm:$0xf]
    %v99 = vld [vmem:[#allocation2 + $0x9c] sm:$0xf]
    %v100 = vld [vmem:[#allocation2 + $0xa0] sm:$0xf]
    %v101 = vld [vmem:[#allocation2 + $0xa4] sm:$0xf]
    %v102 = vld [vmem:[#allocation2 + $0xa8] sm:$0xf]
    %v103 = vld [vmem:[#allocation2 + $0xac] sm:$0xf]
    %v104 = vld [vmem:[#allocation2 + $0xb0] sm:$0xf]
    %v105 = vld [vmem:[#allocation2 + $0xb4] sm:$0xf]
    %v106 = vld [vmem:[#allocation2 + $0xb8] sm:$0xf]
    %v107 = vld [vmem:[#allocation2 + $0xbc] sm:$0xf]
    %v108 = vld [vmem:[#allocation2 + $0xc0] sm:$0xf]
    %v109 = vld [vmem:[#allocation2 + $0xc4] sm:$0xf]
    %v110 = vld [vmem:[#allocation2 + $0xc8] sm:$0xf]
    %v111 = vld [vmem:[#allocation2 + $0xcc] sm:$0xf]
    %v112 = vld [vmem:[#allocation2 + $0xd0] sm:$0xf]
    %v113 = vld [vmem:[#allocation2 + $0xd4] sm:$0xf]
    %v114 = vld [vmem:[#allocation2 + $0xd8] sm:$0xf]
    %v115 = vld [vmem:[#allocation2 + $0xdc] sm:$0xf]
    %v116 = vld [vmem:[#allocation2 + $0xe0] sm:$0xf]
    %v117 = vld [vmem:[#allocation2 + $0xe4] sm:$0xf]
    %v118 = vld [vmem:[#allocation2 + $0xe8] sm:$0xf]
    %v119 = vld [vmem:[#allocation2 + $0xec] sm:$0xf]
    %v120 = vld [vmem:[#allocation2 + $0xf0] sm:$0xf]
    %v121 = vld [vmem:[#allocation2 + $0xf4] sm:$0xf]
    %v122 = vld [vmem:[#allocation2 + $0xf8] sm:$0xf]
    %v123 = vld [vmem:[#allocation2 + $0xfc] sm:$0xf]
    %v124 = vld [vmem:[#allocation5] sm:$0xff]
    %v125 = vld [vmem:[#allocation5 + $0x8] sm:$0xff]
    %v126 = vld [vmem:[#allocation5 + $0x10] sm:$0xff]
    %v127 = vld [vmem:[#allocation5 + $0x18] sm:$0xff]
    %v128 = vld [vmem:[#allocation5 + $0x20] sm:$0xff]
    %v129 = vld [vmem:[#allocation5 + $0x28] sm:$0xff]
    %v130 = vld [vmem:[#allocation5 + $0x30] sm:$0xff]
    %v131 = vld [vmem:[#allocation5 + $0x38] sm:$0xff]
    %v132 = vld [vmem:[#allocation5 + $0x40] sm:$0xff]
    %v133 = vld [vmem:[#allocation5 + $0x48] sm:$0xff]
    %v134 = vld [vmem:[#allocation5 + $0x50] sm:$0xff]
    %v135 = vld [vmem:[#allocation5 + $0x58] sm:$0xff]
    %v136 = vld [vmem:[#allocation5 + $0x60] sm:$0xff]
    %v137 = vld [vmem:[#allocation5 + $0x68] sm:$0xff]
    %v138 = vld [vmem:[#allocation5 + $0x70] sm:$0xff]
    %v139 = vld [vmem:[#allocation5 + $0x78] sm:$0xff]
    %v140 = vld [vmem:[%s2] sm:$0x3]
    %v142 = vlaneseq
    %v143 = vshrl.u32 %v142, 7
    %v144 = vsub.s32 0, %v143
    %v145 = vrot.slane %v140, %v144
    %v146 = vlaneseq
    %v147 = vshrl.u32 %v146, 7
    %v148 = vsub.s32 1, %v147
    %v149 = vrot.slane %v140, %v148
    %v216 = vunpack.c.l.b16 %v60
    %v217 = vunpack.c.l.b16 %v61
    %v218 = vunpack.c.l.b16 %v62
    %v219 = vunpack.c.l.b16 %v63
    %v220 = vunpack.c.l.b16 %v64
    %v221 = vunpack.c.l.b16 %v65
    %v222 = vunpack.c.l.b16 %v66
    %v223 = vunpack.c.l.b16 %v67
    %v224 = vunpack.c.l.b16 %v68
    %v225 = vunpack.c.l.b16 %v69
    %v226 = vunpack.c.l.b16 %v70
    %v227 = vunpack.c.l.b16 %v71
    %v228 = vunpack.c.l.b16 %v72
    %v229 = vunpack.c.l.b16 %v73
    %v230 = vunpack.c.l.b16 %v74
    %v231 = vunpack.c.l.b16 %v75
    %v232 = vunpack.c.l.b16 %v76
    %v233 = vunpack.c.l.b16 %v77
    %v234 = vunpack.c.l.b16 %v78
    %v235 = vunpack.c.l.b16 %v79
    %v236 = vunpack.c.l.b16 %v80
    %v237 = vunpack.c.l.b16 %v81
    %v238 = vunpack.c.l.b16 %v82
    %v239 = vunpack.c.l.b16 %v83
    %v240 = vunpack.c.l.b16 %v84
    %v241 = vunpack.c.l.b16 %v85
    %v242 = vunpack.c.l.b16 %v86
    %v243 = vunpack.c.l.b16 %v87
    %v244 = vunpack.c.l.b16 %v88
    %v245 = vunpack.c.l.b16 %v89
    %v246 = vunpack.c.l.b16 %v90
    %v247 = vunpack.c.l.b16 %v91
    %v248 = vunpack.c.l.b16 %v92
    %v249 = vunpack.c.l.b16 %v93
    %v250 = vunpack.c.l.b16 %v94
    %v251 = vunpack.c.l.b16 %v95
    %v252 = vunpack.c.l.b16 %v96
    %v253 = vunpack.c.l.b16 %v97
    %v254 = vunpack.c.l.b16 %v98
    %v255 = vunpack.c.l.b16 %v99
    %v256 = vunpack.c.l.b16 %v100
    %v257 = vunpack.c.l.b16 %v101
    %v258 = vunpack.c.l.b16 %v102
    %v259 = vunpack.c.l.b16 %v103
    %v260 = vunpack.c.l.b16 %v104
    %v261 = vunpack.c.l.b16 %v105
    %v262 = vunpack.c.l.b16 %v106
    %v263 = vunpack.c.l.b16 %v107
    %v264 = vunpack.c.l.b16 %v108
    %v265 = vunpack.c.l.b16 %v109
    %v266 = vunpack.c.l.b16 %v110
    %v267 = vunpack.c.l.b16 %v111
    %v268 = vunpack.c.l.b16 %v112
    %v269 = vunpack.c.l.b16 %v113
    %v270 = vunpack.c.l.b16 %v114
    %v271 = vunpack.c.l.b16 %v115
    %v272 = vunpack.c.l.b16 %v116
    %v273 = vunpack.c.l.b16 %v117
    %v274 = vunpack.c.l.b16 %v118
    %v275 = vunpack.c.l.b16 %v119
    %v276 = vunpack.c.l.b16 %v120
    %v277 = vunpack.c.l.b16 %v121
    %v278 = vunpack.c.l.b16 %v122
    %v279 = vunpack.c.l.b16 %v123
    %v280 = vpack.c.b16 %v217, %v216
    %v281 = vpack.c.b16 %v219, %v218
    %v282 = vpack.c.b16 %v221, %v220
    %v283 = vpack.c.b16 %v223, %v222
    %v284 = vpack.c.b16 %v225, %v224
    %v285 = vpack.c.b16 %v227, %v226
    %v286 = vpack.c.b16 %v229, %v228
    %v287 = vpack.c.b16 %v231, %v230
    %v288 = vpack.c.b16 %v233, %v232
    %v289 = vpack.c.b16 %v235, %v234
    %v290 = vpack.c.b16 %v237, %v236
    %v291 = vpack.c.b16 %v239, %v238
    %v292 = vpack.c.b16 %v241, %v240
    %v293 = vpack.c.b16 %v243, %v242
    %v294 = vpack.c.b16 %v245, %v244
    %v295 = vpack.c.b16 %v247, %v246
    %v296 = vpack.c.b16 %v249, %v248
    %v297 = vpack.c.b16 %v251, %v250
    %v298 = vpack.c.b16 %v253, %v252
    %v299 = vpack.c.b16 %v255, %v254
    %v300 = vpack.c.b16 %v257, %v256
    %v301 = vpack.c.b16 %v259, %v258
    %v302 = vpack.c.b16 %v261, %v260
    %v303 = vpack.c.b16 %v263, %v262
    %v304 = vpack.c.b16 %v265, %v264
    %v305 = vpack.c.b16 %v267, %v266
    %v306 = vpack.c.b16 %v269, %v268
    %v307 = vpack.c.b16 %v271, %v270
    %v308 = vpack.c.b16 %v273, %v272
    %v309 = vpack.c.b16 %v275, %v274
    %v310 = vpack.c.b16 %v277, %v276
    %v311 = vpack.c.b16 %v279, %v278
    %v360 = vunpack.c.l.b16 %v124
    %v361 = vunpack.c.h.b16 %v124
    %v362 = vunpack.c.l.b16 %v125
    %v363 = vunpack.c.h.b16 %v125
    %v364 = vunpack.c.l.b16 %v126
    %v365 = vunpack.c.h.b16 %v126
    %v366 = vunpack.c.l.b16 %v127
    %v367 = vunpack.c.h.b16 %v127
    %v368 = vunpack.c.l.b16 %v128
    %v369 = vunpack.c.h.b16 %v128
    %v370 = vunpack.c.l.b16 %v129
    %v371 = vunpack.c.h.b16 %v129
    %v372 = vunpack.c.l.b16 %v130
    %v373 = vunpack.c.h.b16 %v130
    %v374 = vunpack.c.l.b16 %v131
    %v375 = vunpack.c.h.b16 %v131
    %v376 = vunpack.c.l.b16 %v132
    %v377 = vunpack.c.h.b16 %v132
    %v378 = vunpack.c.l.b16 %v133
    %v379 = vunpack.c.h.b16 %v133
    %v380 = vunpack.c.l.b16 %v134
    %v381 = vunpack.c.h.b16 %v134
    %v382 = vunpack.c.l.b16 %v135
    %v383 = vunpack.c.h.b16 %v135
    %v384 = vunpack.c.l.b16 %v136
    %v385 = vunpack.c.h.b16 %v136
    %v386 = vunpack.c.l.b16 %v137
    %v387 = vunpack.c.h.b16 %v137
    %v388 = vunpack.c.l.b16 %v138
    %v389 = vunpack.c.h.b16 %v138
    %v390 = vunpack.c.l.b16 %v139
    %v391 = vunpack.c.h.b16 %v139
    %v392 = vpack.c.b16 %v362, %v360
    %v393 = vpack.c.b16 %v363, %v361
    %v394 = vpack.c.b16 %v366, %v364
    %v395 = vpack.c.b16 %v367, %v365
    %v396 = vpack.c.b16 %v370, %v368
    %v397 = vpack.c.b16 %v371, %v369
    %v398 = vpack.c.b16 %v374, %v372
    %v399 = vpack.c.b16 %v375, %v373
    %v400 = vpack.c.b16 %v378, %v376
    %v401 = vpack.c.b16 %v379, %v377
    %v402 = vpack.c.b16 %v382, %v380
    %v403 = vpack.c.b16 %v383, %v381
    %v404 = vpack.c.b16 %v386, %v384
    %v405 = vpack.c.b16 %v387, %v385
    %v406 = vpack.c.b16 %v390, %v388
    %v407 = vpack.c.b16 %v391, %v389
    %424 = vmatprep.subr.bf16.mxu0 %v393
    %425 = vmatpush1.bf16.msra.mxu0 %v392
    %426 = vmatprep.subr.bf16.mxu0 %v395
    %427 = vmatpush1.bf16.msra.mxu0 %v394
    %428 = vmatprep.subr.bf16.mxu0 %v397
    %429 = vmatpush1.bf16.msra.mxu0 %v396
    %430 = vmatprep.subr.bf16.mxu0 %v399
    %431 = vmatpush1.bf16.msra.mxu0 %v398
    %432 = vmatprep.subr.bf16.mxu0 %v401
    %433 = vmatpush1.bf16.msra.mxu0 %v400
    %434 = vmatprep.subr.bf16.mxu0 %v403
    %435 = vmatpush1.bf16.msra.mxu0 %v402
    %436 = vmatprep.subr.bf16.mxu0 %v405
    %437 = vmatpush1.bf16.msra.mxu0 %v404
    %438 = vmatprep.subr.bf16.mxu0 %v407
    %439 = vmatpush1.bf16.msra.mxu0 %v406
    %440 = vmatprep.subr.bf16.mxu0 0
    %441 = vmatpush1.bf16.msra.mxu0 0
    %442 = vmatprep.subr.bf16.mxu0 0
    %443 = vmatpush1.bf16.msra.mxu0 0
    %444 = vmatprep.subr.bf16.mxu0 0
    %445 = vmatpush1.bf16.msra.mxu0 0
    %446 = vmatprep.subr.bf16.mxu0 0
    %447 = vmatpush1.bf16.msra.mxu0 0
    %448 = vmatprep.subr.bf16.mxu0 0
    %449 = vmatpush1.bf16.msra.mxu0 0
    %450 = vmatprep.subr.bf16.mxu0 0
    %451 = vmatpush1.bf16.msra.mxu0 0
    %452 = vmatprep.subr.bf16.mxu0 0
    %453 = vmatpush1.bf16.msra.mxu0 0
    %454 = vmatprep.subr.bf16.mxu0 0
    %455 = vmatpush1.bf16.msra.mxu0 0
    %456 = vmatprep.mubr.bf16.mxu0 0
    %457 = vmatmul.mubr.bf16.gmra.mrb[0].mxu0 %v280
    %v458 = vpop.f32.mrb[0].mxu0
    %v459 = vadd.f32 %v145, %v458
    %v460 = vpop.f32.mrb[0].mxu0
    %v461 = vadd.f32 %v149, %v460
    %v462 = vpop.f32.mrb[0].mxu0
    %v463 = vadd.f32 %v145, %v462
    %v464 = vpop.f32.mrb[0].mxu0
    %v465 = vadd.f32 %v149, %v464
    %466 = vmatprep.mubr.bf16.mxu0 0
    %467 = vmatmul.mubr.bf16.gmra.mrb[0].mxu0 %v281
    %v468 = vpop.f32.mrb[0].mxu0
    %v469 = vadd.f32 %v145, %v468
    %v470 = vpop.f32.mrb[0].mxu0
    %v471 = vadd.f32 %v149, %v470
    %v472 = vpop.f32.mrb[0].mxu0
    %v473 = vadd.f32 %v145, %v472
    %v474 = vpop.f32.mrb[0].mxu0
    %v475 = vadd.f32 %v149, %v474
    %476 = vmatprep.mubr.bf16.mxu0 0
    %477 = vmatmul.mubr.bf16.gmra.mrb[0].mxu0 %v282
    %v478 = vpop.f32.mrb[0].mxu0
    %v479 = vadd.f32 %v145, %v478
    %v480 = vpop.f32.mrb[0].mxu0
    %v481 = vadd.f32 %v149, %v480
    %v482 = vpop.f32.mrb[0].mxu0
    %v483 = vadd.f32 %v145, %v482
    %v484 = vpop.f32.mrb[0].mxu0
    %v485 = vadd.f32 %v149, %v484
    %486 = vmatprep.mubr.bf16.mxu0 0
    %487 = vmatmul.mubr.bf16.gmra.mrb[0].mxu0 %v283
    %v488 = vpop.f32.mrb[0].mxu0
    %v489 = vadd.f32 %v145, %v488
    %v490 = vpop.f32.mrb[0].mxu0
    %v491 = vadd.f32 %v149, %v490
    %v492 = vpop.f32.mrb[0].mxu0
    %v493 = vadd.f32 %v145, %v492
    %v494 = vpop.f32.mrb[0].mxu0
    %v495 = vadd.f32 %v149, %v494
    %496 = vmatprep.mubr.bf16.mxu0 0
    %497 = vmatmul.mubr.bf16.gmra.mrb[0].mxu0 %v284
    %v498 = vpop.f32.mrb[0].mxu0
    %v499 = vadd.f32 %v145, %v498
    %v500 = vpop.f32.mrb[0].mxu0
    %v501 = vadd.f32 %v149, %v500
    %v502 = vpop.f32.mrb[0].mxu0
    %v503 = vadd.f32 %v145, %v502
    %v504 = vpop.f32.mrb[0].mxu0
    %v505 = vadd.f32 %v149, %v504
    %506 = vmatprep.mubr.bf16.mxu0 0
    %507 = vmatmul.mubr.bf16.gmra.mrb[0].mxu0 %v285
    %v508 = vpop.f32.mrb[0].mxu0
    %v509 = vadd.f32 %v145, %v508
    %v510 = vpop.f32.mrb[0].mxu0
    %v511 = vadd.f32 %v149, %v510
    %v512 = vpop.f32.mrb[0].mxu0
    %v513 = vadd.f32 %v145, %v512
    %v514 = vpop.f32.mrb[0].mxu0
    %v515 = vadd.f32 %v149, %v514
    %516 = vmatprep.mubr.bf16.mxu0 0
    %517 = vmatmul.mubr.bf16.gmra.mrb[0].mxu0 %v286
    %v518 = vpop.f32.mrb[0].mxu0
    %v519 = vadd.f32 %v145, %v518
    %v520 = vpop.f32.mrb[0].mxu0
    %v521 = vadd.f32 %v149, %v520
    %v522 = vpop.f32.mrb[0].mxu0
    %v523 = vadd.f32 %v145, %v522
    %v524 = vpop.f32.mrb[0].mxu0
    %v525 = vadd.f32 %v149, %v524
    %526 = vmatprep.mubr.bf16.mxu0 0
    %527 = vmatmul.mubr.bf16.gmra.mrb[0].mxu0 %v287
    %v528 = vpop.f32.mrb[0].mxu0
    %v529 = vadd.f32 %v145, %v528
    %v530 = vpop.f32.mrb[0].mxu0
    %v531 = vadd.f32 %v149, %v530
    %v532 = vpop.f32.mrb[0].mxu0
    %v533 = vadd.f32 %v145, %v532
    %v534 = vpop.f32.mrb[0].mxu0
    %v535 = vadd.f32 %v149, %v534
    %536 = vmatprep.mubr.bf16.mxu0 0
    %537 = vmatmul.mubr.bf16.gmra.mrb[0].mxu0 %v288
    %v538 = vpop.f32.mrb[0].mxu0
    %v539 = vadd.f32 %v145, %v538
    %v540 = vpop.f32.mrb[0].mxu0
    %v541 = vadd.f32 %v149, %v540
    %v542 = vpop.f32.mrb[0].mxu0
    %v543 = vadd.f32 %v145, %v542
    %v544 = vpop.f32.mrb[0].mxu0
    %v545 = vadd.f32 %v149, %v544
    %546 = vmatprep.mubr.bf16.mxu0 0
    %547 = vmatmul.mubr.bf16.gmra.mrb[0].mxu0 %v289
    %v548 = vpop.f32.mrb[0].mxu0
    %v549 = vadd.f32 %v145, %v548
    %v550 = vpop.f32.mrb[0].mxu0
    %v551 = vadd.f32 %v149, %v550
    %v552 = vpop.f32.mrb[0].mxu0
    %v553 = vadd.f32 %v145, %v552
    %v554 = vpop.f32.mrb[0].mxu0
    %v555 = vadd.f32 %v149, %v554
    %556 = vmatprep.mubr.bf16.mxu0 0
    %557 = vmatmul.mubr.bf16.gmra.mrb[0].mxu0 %v290
    %v558 = vpop.f32.mrb[0].mxu0
    %v559 = vadd.f32 %v145, %v558
    %v560 = vpop.f32.mrb[0].mxu0
    %v561 = vadd.f32 %v149, %v560
    %v562 = vpop.f32.mrb[0].mxu0
    %v563 = vadd.f32 %v145, %v562
    %v564 = vpop.f32.mrb[0].mxu0
    %v565 = vadd.f32 %v149, %v564
    %566 = vmatprep.mubr.bf16.mxu0 0
    %567 = vmatmul.mubr.bf16.gmra.mrb[0].mxu0 %v291
    %v568 = vpop.f32.mrb[0].mxu0
    %v569 = vadd.f32 %v145, %v568
    %v570 = vpop.f32.mrb[0].mxu0
    %v571 = vadd.f32 %v149, %v570
    %v572 = vpop.f32.mrb[0].mxu0
    %v573 = vadd.f32 %v145, %v572
    %v574 = vpop.f32.mrb[0].mxu0
    %v575 = vadd.f32 %v149, %v574
    %576 = vmatprep.mubr.bf16.mxu0 0
    %577 = vmatmul.mubr.bf16.gmra.mrb[0].mxu0 %v292
    %v578 = vpop.f32.mrb[0].mxu0
    %v579 = vadd.f32 %v145, %v578
    %v580 = vpop.f32.mrb[0].mxu0
    %v581 = vadd.f32 %v149, %v580
    %v582 = vpop.f32.mrb[0].mxu0
    %v583 = vadd.f32 %v145, %v582
    %v584 = vpop.f32.mrb[0].mxu0
    %v585 = vadd.f32 %v149, %v584
    %586 = vmatprep.mubr.bf16.mxu0 0
    %587 = vmatmul.mubr.bf16.gmra.mrb[0].mxu0 %v293
    %v588 = vpop.f32.mrb[0].mxu0
    %v589 = vadd.f32 %v145, %v588
    %v590 = vpop.f32.mrb[0].mxu0
    %v591 = vadd.f32 %v149, %v590
    %v592 = vpop.f32.mrb[0].mxu0
    %v593 = vadd.f32 %v145, %v592
    %v594 = vpop.f32.mrb[0].mxu0
    %v595 = vadd.f32 %v149, %v594
    %596 = vmatprep.mubr.bf16.mxu0 0
    %597 = vmatmul.mubr.bf16.gmra.mrb[0].mxu0 %v294
    %v598 = vpop.f32.mrb[0].mxu0
    %v599 = vadd.f32 %v145, %v598
    %v600 = vpop.f32.mrb[0].mxu0
    %v601 = vadd.f32 %v149, %v600
    %v602 = vpop.f32.mrb[0].mxu0
    %v603 = vadd.f32 %v145, %v602
    %v604 = vpop.f32.mrb[0].mxu0
    %v605 = vadd.f32 %v149, %v604
    %606 = vmatprep.mubr.bf16.mxu0 0
    %607 = vmatmul.mubr.bf16.gmra.mrb[0].mxu0 %v295
    %v608 = vpop.f32.mrb[0].mxu0
    %v609 = vadd.f32 %v145, %v608
    %v610 = vpop.f32.mrb[0].mxu0
    %v611 = vadd.f32 %v149, %v610
    %v612 = vpop.f32.mrb[0].mxu0
    %v613 = vadd.f32 %v145, %v612
    %v614 = vpop.f32.mrb[0].mxu0
    %v615 = vadd.f32 %v149, %v614
    %616 = vmatprep.mubr.bf16.mxu0 0
    %617 = vmatmul.mubr.bf16.gmra.mrb[0].mxu0 %v296
    %v618 = vpop.f32.mrb[0].mxu0
    %v619 = vadd.f32 %v145, %v618
    %v620 = vpop.f32.mrb[0].mxu0
    %v621 = vadd.f32 %v149, %v620
    %v622 = vpop.f32.mrb[0].mxu0
    %v623 = vadd.f32 %v145, %v622
    %v624 = vpop.f32.mrb[0].mxu0
    %v625 = vadd.f32 %v149, %v624
    %626 = vmatprep.mubr.bf16.mxu0 0
    %627 = vmatmul.mubr.bf16.gmra.mrb[0].mxu0 %v297
    %v628 = vpop.f32.mrb[0].mxu0
    %v629 = vadd.f32 %v145, %v628
    %v630 = vpop.f32.mrb[0].mxu0
    %v631 = vadd.f32 %v149, %v630
    %v632 = vpop.f32.mrb[0].mxu0
    %v633 = vadd.f32 %v145, %v632
    %v634 = vpop.f32.mrb[0].mxu0
    %v635 = vadd.f32 %v149, %v634
    %636 = vmatprep.mubr.bf16.mxu0 0
    %637 = vmatmul.mubr.bf16.gmra.mrb[0].mxu0 %v298
    %v638 = vpop.f32.mrb[0].mxu0
    %v639 = vadd.f32 %v145, %v638
    %v640 = vpop.f32.mrb[0].mxu0
    %v641 = vadd.f32 %v149, %v640
    %v642 = vpop.f32.mrb[0].mxu0
    %v643 = vadd.f32 %v145, %v642
    %v644 = vpop.f32.mrb[0].mxu0
    %v645 = vadd.f32 %v149, %v644
    %646 = vmatprep.mubr.bf16.mxu0 0
    %647 = vmatmul.mubr.bf16.gmra.mrb[0].mxu0 %v299
    %v648 = vpop.f32.mrb[0].mxu0
    %v649 = vadd.f32 %v145, %v648
    %v650 = vpop.f32.mrb[0].mxu0
    %v651 = vadd.f32 %v149, %v650
    %v652 = vpop.f32.mrb[0].mxu0
    %v653 = vadd.f32 %v145, %v652
    %v654 = vpop.f32.mrb[0].mxu0
    %v655 = vadd.f32 %v149, %v654
    %656 = vmatprep.mubr.bf16.mxu0 0
    %657 = vmatmul.mubr.bf16.gmra.mrb[0].mxu0 %v300
    %v658 = vpop.f32.mrb[0].mxu0
    %v659 = vadd.f32 %v145, %v658
    %v660 = vpop.f32.mrb[0].mxu0
    %v661 = vadd.f32 %v149, %v660
    %v662 = vpop.f32.mrb[0].mxu0
    %v663 = vadd.f32 %v145, %v662
    %v664 = vpop.f32.mrb[0].mxu0
    %v665 = vadd.f32 %v149, %v664
    %666 = vmatprep.mubr.bf16.mxu0 0
    %667 = vmatmul.mubr.bf16.gmra.mrb[0].mxu0 %v301
    %v668 = vpop.f32.mrb[0].mxu0
    %v669 = vadd.f32 %v145, %v668
    %v670 = vpop.f32.mrb[0].mxu0
    %v671 = vadd.f32 %v149, %v670
    %v672 = vpop.f32.mrb[0].mxu0
    %v673 = vadd.f32 %v145, %v672
    %v674 = vpop.f32.mrb[0].mxu0
    %v675 = vadd.f32 %v149, %v674
    %676 = vmatprep.mubr.bf16.mxu0 0
    %677 = vmatmul.mubr.bf16.gmra.mrb[0].mxu0 %v302
    %v678 = vpop.f32.mrb[0].mxu0
    %v679 = vadd.f32 %v145, %v678
    %v680 = vpop.f32.mrb[0].mxu0
    %v681 = vadd.f32 %v149, %v680
    %v682 = vpop.f32.mrb[0].mxu0
    %v683 = vadd.f32 %v145, %v682
    %v684 = vpop.f32.mrb[0].mxu0
    %v685 = vadd.f32 %v149, %v684
    %686 = vmatprep.mubr.bf16.mxu0 0
    %687 = vmatmul.mubr.bf16.gmra.mrb[0].mxu0 %v303
    %v688 = vpop.f32.mrb[0].mxu0
    %v689 = vadd.f32 %v145, %v688
    %v690 = vpop.f32.mrb[0].mxu0
    %v691 = vadd.f32 %v149, %v690
    %v692 = vpop.f32.mrb[0].mxu0
    %v693 = vadd.f32 %v145, %v692
    %v694 = vpop.f32.mrb[0].mxu0
    %v695 = vadd.f32 %v149, %v694
    %696 = vmatprep.mubr.bf16.mxu0 0
    %697 = vmatmul.mubr.bf16.gmra.mrb[0].mxu0 %v304
    %v698 = vpop.f32.mrb[0].mxu0
    %v699 = vadd.f32 %v145, %v698
    %v700 = vpop.f32.mrb[0].mxu0
    %v701 = vadd.f32 %v149, %v700
    %v702 = vpop.f32.mrb[0].mxu0
    %v703 = vadd.f32 %v145, %v702
    %v704 = vpop.f32.mrb[0].mxu0
    %v705 = vadd.f32 %v149, %v704
    %706 = vmatprep.mubr.bf16.mxu0 0
    %707 = vmatmul.mubr.bf16.gmra.mrb[0].mxu0 %v305
    %v708 = vpop.f32.mrb[0].mxu0
    %v709 = vadd.f32 %v145, %v708
    %v710 = vpop.f32.mrb[0].mxu0
    %v711 = vadd.f32 %v149, %v710
    %v712 = vpop.f32.mrb[0].mxu0
    %v713 = vadd.f32 %v145, %v712
    %v714 = vpop.f32.mrb[0].mxu0
    %v715 = vadd.f32 %v149, %v714
    %716 = vmatprep.mubr.bf16.mxu0 0
    %717 = vmatmul.mubr.bf16.gmra.mrb[0].mxu0 %v306
    %v718 = vpop.f32.mrb[0].mxu0
    %v719 = vadd.f32 %v145, %v718
    %v720 = vpop.f32.mrb[0].mxu0
    %v721 = vadd.f32 %v149, %v720
    %v722 = vpop.f32.mrb[0].mxu0
    %v723 = vadd.f32 %v145, %v722
    %v724 = vpop.f32.mrb[0].mxu0
    %v725 = vadd.f32 %v149, %v724
    %726 = vmatprep.mubr.bf16.mxu0 0
    %727 = vmatmul.mubr.bf16.gmra.mrb[0].mxu0 %v307
    %v728 = vpop.f32.mrb[0].mxu0
    %v729 = vadd.f32 %v145, %v728
    %v730 = vpop.f32.mrb[0].mxu0
    %v731 = vadd.f32 %v149, %v730
    %v732 = vpop.f32.mrb[0].mxu0
    %v733 = vadd.f32 %v145, %v732
    %v734 = vpop.f32.mrb[0].mxu0
    %v735 = vadd.f32 %v149, %v734
    %736 = vmatprep.mubr.bf16.mxu0 0
    %737 = vmatmul.mubr.bf16.gmra.mrb[0].mxu0 %v308
    %v738 = vpop.f32.mrb[0].mxu0
    %v739 = vadd.f32 %v145, %v738
    %v740 = vpop.f32.mrb[0].mxu0
    %v741 = vadd.f32 %v149, %v740
    %v742 = vpop.f32.mrb[0].mxu0
    %v743 = vadd.f32 %v145, %v742
    %v744 = vpop.f32.mrb[0].mxu0
    %v745 = vadd.f32 %v149, %v744
    %746 = vmatprep.mubr.bf16.mxu0 0
    %747 = vmatmul.mubr.bf16.gmra.mrb[0].mxu0 %v309
    %v748 = vpop.f32.mrb[0].mxu0
    %v749 = vadd.f32 %v145, %v748
    %v750 = vpop.f32.mrb[0].mxu0
    %v751 = vadd.f32 %v149, %v750
    %v752 = vpop.f32.mrb[0].mxu0
    %v753 = vadd.f32 %v145, %v752
    %v754 = vpop.f32.mrb[0].mxu0
    %v755 = vadd.f32 %v149, %v754
    %756 = vmatprep.mubr.bf16.mxu0 0
    %757 = vmatmul.mubr.bf16.gmra.mrb[0].mxu0 %v310
    %v758 = vpop.f32.mrb[0].mxu0
    %v759 = vadd.f32 %v145, %v758
    %v760 = vpop.f32.mrb[0].mxu0
    %v761 = vadd.f32 %v149, %v760
    %v762 = vpop.f32.mrb[0].mxu0
    %v763 = vadd.f32 %v145, %v762
    %v764 = vpop.f32.mrb[0].mxu0
    %v765 = vadd.f32 %v149, %v764
    %766 = vmatprep.mubr.bf16.mxu0 0
    %767 = vmatmul.mubr.bf16.gmra.mrb[0].mxu0 %v311
    %v768 = vpop.f32.mrb[0].mxu0
    %v769 = vadd.f32 %v145, %v768
    %v770 = vpop.f32.mrb[0].mxu0
    %v771 = vadd.f32 %v149, %v770
    %v772 = vpop.f32.mrb[0].mxu0
    %v773 = vadd.f32 %v145, %v772
    %v774 = vpop.f32.mrb[0].mxu0
    %v775 = vadd.f32 %v149, %v774
    %776 = vdwg.mxu0
    %v777 = vtanh.pop %v459
    %v778 = vtanh.pop %v461
    %v779 = vtanh.pop %v463
    %v780 = vtanh.pop %v465
    %v781 = vtanh.pop %v469
    %v782 = vtanh.pop %v471
    %v783 = vtanh.pop %v473
    %v784 = vtanh.pop %v475
    %v785 = vtanh.pop %v479
    %v786 = vtanh.pop %v481
    %v787 = vtanh.pop %v483
    %v788 = vtanh.pop %v485
    %v789 = vtanh.pop %v489
    %v790 = vtanh.pop %v491
    %v791 = vtanh.pop %v493
    %v792 = vtanh.pop %v495
    %v793 = vtanh.pop %v499
    %v794 = vtanh.pop %v501
    %v795 = vtanh.pop %v503
    %v796 = vtanh.pop %v505
    %v797 = vtanh.pop %v509
    %v798 = vtanh.pop %v511
    %v799 = vtanh.pop %v513
    %v800 = vtanh.pop %v515
    %v801 = vtanh.pop %v519
    %v802 = vtanh.pop %v521
    %v803 = vtanh.pop %v523
    %v804 = vtanh.pop %v525
    %v805 = vtanh.pop %v529
    %v806 = vtanh.pop %v531
    %v807 = vtanh.pop %v533
    %v808 = vtanh.pop %v535
    %v809 = vtanh.pop %v539
    %v810 = vtanh.pop %v541
    %v811 = vtanh.pop %v543
    %v812 = vtanh.pop %v545
    %v813 = vtanh.pop %v549
    %v814 = vtanh.pop %v551
    %v815 = vtanh.pop %v553
    %v816 = vtanh.pop %v555
    %v817 = vtanh.pop %v559
    %v818 = vtanh.pop %v561
    %v819 = vtanh.pop %v563
    %v820 = vtanh.pop %v565
    %v821 = vtanh.pop %v569
    %v822 = vtanh.pop %v571
    %v823 = vtanh.pop %v573
    %v824 = vtanh.pop %v575
    %v825 = vtanh.pop %v579
    %v826 = vtanh.pop %v581
    %v827 = vtanh.pop %v583
    %v828 = vtanh.pop %v585
    %v829 = vtanh.pop %v589
    %v830 = vtanh.pop %v591
    %v831 = vtanh.pop %v593
    %v832 = vtanh.pop %v595
    %v833 = vtanh.pop %v599
    %v834 = vtanh.pop %v601
    %v835 = vtanh.pop %v603
    %v836 = vtanh.pop %v605
    %v837 = vtanh.pop %v609
    %v838 = vtanh.pop %v611
    %v839 = vtanh.pop %v613
    %v840 = vtanh.pop %v615
    %v841 = vtanh.pop %v619
    %v842 = vtanh.pop %v621
    %v843 = vtanh.pop %v623
    %v844 = vtanh.pop %v625
    %v845 = vtanh.pop %v629
    %v846 = vtanh.pop %v631
    %v847 = vtanh.pop %v633
    %v848 = vtanh.pop %v635
    %v849 = vtanh.pop %v639
    %v850 = vtanh.pop %v641
    %v851 = vtanh.pop %v643
    %v852 = vtanh.pop %v645
    %v853 = vtanh.pop %v649
    %v854 = vtanh.pop %v651
    %v855 = vtanh.pop %v653
    %v856 = vtanh.pop %v655
    %v857 = vtanh.pop %v659
    %v858 = vtanh.pop %v661
    %v859 = vtanh.pop %v663
    %v860 = vtanh.pop %v665
    %v861 = vtanh.pop %v669
    %v862 = vtanh.pop %v671
    %v863 = vtanh.pop %v673
    %v864 = vtanh.pop %v675
    %v865 = vtanh.pop %v679
    %v866 = vtanh.pop %v681
    %v867 = vtanh.pop %v683
    %v868 = vtanh.pop %v685
    %v869 = vtanh.pop %v689
    %v870 = vtanh.pop %v691
    %v871 = vtanh.pop %v693
    %v872 = vtanh.pop %v695
    %v873 = vtanh.pop %v699
    %v874 = vtanh.pop %v701
    %v875 = vtanh.pop %v703
    %v876 = vtanh.pop %v705
    %v877 = vtanh.pop %v709
    %v878 = vtanh.pop %v711
    %v879 = vtanh.pop %v713
    %v880 = vtanh.pop %v715
    %v881 = vtanh.pop %v719
    %v882 = vtanh.pop %v721
    %v883 = vtanh.pop %v723
    %v884 = vtanh.pop %v725
    %v885 = vtanh.pop %v729
    %v886 = vtanh.pop %v731
    %v887 = vtanh.pop %v733
    %v888 = vtanh.pop %v735
    %v889 = vtanh.pop %v739
    %v890 = vtanh.pop %v741
    %v891 = vtanh.pop %v743
    %v892 = vtanh.pop %v745
    %v893 = vtanh.pop %v749
    %v894 = vtanh.pop %v751
    %v895 = vtanh.pop %v753
    %v896 = vtanh.pop %v755
    %v897 = vtanh.pop %v759
    %v898 = vtanh.pop %v761
    %v899 = vtanh.pop %v763
    %v900 = vtanh.pop %v765
    %v901 = vtanh.pop %v769
    %v902 = vtanh.pop %v771
    %v903 = vtanh.pop %v773
    %v904 = vtanh.pop %v775
    %v905 = vmax.f32 %v777, %v793
    %v906 = vmax.f32 %v778, %v794
    %v907 = vmax.f32 %v779, %v795
    %v908 = vmax.f32 %v780, %v796
    %v909 = vmax.f32 %v781, %v797
    %v910 = vmax.f32 %v782, %v798
    %v911 = vmax.f32 %v783, %v799
    %v912 = vmax.f32 %v784, %v800
    %v913 = vmax.f32 %v785, %v801
    %v914 = vmax.f32 %v786, %v802
    %v915 = vmax.f32 %v787, %v803
    %v916 = vmax.f32 %v788, %v804
    %v917 = vmax.f32 %v789, %v805
    %v918 = vmax.f32 %v790, %v806
    %v919 = vmax.f32 %v791, %v807
    %v920 = vmax.f32 %v792, %v808
    %v921 = vmax.f32 %v905, %v809
    %v922 = vmax.f32 %v906, %v810
    %v923 = vmax.f32 %v907, %v811
    %v924 = vmax.f32 %v908, %v812
    %v925 = vmax.f32 %v909, %v813
    %v926 = vmax.f32 %v910, %v814
    %v927 = vmax.f32 %v911, %v815
    %v928 = vmax.f32 %v912, %v816
    %v929 = vmax.f32 %v913, %v817
    %v930 = vmax.f32 %v914, %v818
    %v931 = vmax.f32 %v915, %v819
    %v932 = vmax.f32 %v916, %v820
    %v933 = vmax.f32 %v917, %v821
    %v934 = vmax.f32 %v918, %v822
    %v935 = vmax.f32 %v919, %v823
    %v936 = vmax.f32 %v920, %v824
    %v937 = vmax.f32 %v921, %v825
    %v938 = vmax.f32 %v922, %v826
    %v939 = vmax.f32 %v923, %v827
    %v940 = vmax.f32 %v924, %v828
    %v941 = vmax.f32 %v925, %v829
    %v942 = vmax.f32 %v926, %v830
    %v943 = vmax.f32 %v927, %v831
    %v944 = vmax.f32 %v928, %v832
    %v945 = vmax.f32 %v929, %v833
    %v946 = vmax.f32 %v930, %v834
    %v947 = vmax.f32 %v931, %v835
    %v948 = vmax.f32 %v932, %v836
    %v949 = vmax.f32 %v933, %v837
    %v950 = vmax.f32 %v934, %v838
    %v951 = vmax.f32 %v935, %v839
    %v952 = vmax.f32 %v936, %v840
    %v953 = vmax.f32 %v937, %v841
    %v954 = vmax.f32 %v938, %v842
    %v955 = vmax.f32 %v939, %v843
    %v956 = vmax.f32 %v940, %v844
    %v957 = vmax.f32 %v941, %v845
    %v958 = vmax.f32 %v942, %v846
    %v959 = vmax.f32 %v943, %v847
    %v960 = vmax.f32 %v944, %v848
    %v961 = vmax.f32 %v945, %v849
    %v962 = vmax.f32 %v946, %v850
    %v963 = vmax.f32 %v947, %v851
    %v964 = vmax.f32 %v948, %v852
    %v965 = vmax.f32 %v949, %v853
    %v966 = vmax.f32 %v950, %v854
    %v967 = vmax.f32 %v951, %v855
    %v968 = vmax.f32 %v952, %v856
    %v969 = vmax.f32 %v953, %v857
    %v970 = vmax.f32 %v954, %v858
    %v971 = vmax.f32 %v955, %v859
    %v972 = vmax.f32 %v956, %v860
    %v973 = vmax.f32 %v957, %v861
    %v974 = vmax.f32 %v958, %v862
    %v975 = vmax.f32 %v959, %v863
    %v976 = vmax.f32 %v960, %v864
    %v977 = vmax.f32 %v961, %v865
    %v978 = vmax.f32 %v962, %v866
    %v979 = vmax.f32 %v963, %v867
    %v980 = vmax.f32 %v964, %v868
    %v981 = vmax.f32 %v965, %v869
    %v982 = vmax.f32 %v966, %v870
    %v983 = vmax.f32 %v967, %v871
    %v984 = vmax.f32 %v968, %v872
    %v985 = vmax.f32 %v969, %v873
    %v986 = vmax.f32 %v970, %v874
    %v987 = vmax.f32 %v971, %v875
    %v988 = vmax.f32 %v972, %v876
    %v989 = vmax.f32 %v973, %v877
    %v990 = vmax.f32 %v974, %v878
    %v991 = vmax.f32 %v975, %v879
    %v992 = vmax.f32 %v976, %v880
    %v993 = vmax.f32 %v977, %v881
    %v994 = vmax.f32 %v978, %v882
    %v995 = vmax.f32 %v979, %v883
    %v996 = vmax.f32 %v980, %v884
    %v997 = vmax.f32 %v981, %v885
    %v998 = vmax.f32 %v982, %v886
    %v999 = vmax.f32 %v983, %v887
    %v1000 = vmax.f32 %v984, %v888
    %v1001 = vmax.f32 %v985, %v889
    %v1002 = vmax.f32 %v986, %v890
    %v1003 = vmax.f32 %v987, %v891
    %v1004 = vmax.f32 %v988, %v892
    %v1005 = vmax.f32 %v989, %v893
    %v1006 = vmax.f32 %v990, %v894
    %v1007 = vmax.f32 %v991, %v895
    %v1008 = vmax.f32 %v992, %v896
    %v1009 = vmax.f32 %v993, %v897
    %v1010 = vmax.f32 %v994, %v898
    %v1011 = vmax.f32 %v995, %v899
    %v1012 = vmax.f32 %v996, %v900
    %v1013 = vmax.f32 %v997, %v901
    %v1014 = vmax.f32 %v998, %v902
    %v1015 = vmax.f32 %v999, %v903
    %v1016 = vmax.f32 %v1000, %v904
    %v1017 = vpack.c.bf16 %v1003, %v1001
    %v1018 = vpack.c.bf16 %v1004, %v1002
    %v1019 = vpack.c.bf16 %v1007, %v1005
    %v1020 = vpack.c.bf16 %v1008, %v1006
    %v1021 = vpack.c.bf16 %v1011, %v1009
    %v1022 = vpack.c.bf16 %v1012, %v1010
    %v1023 = vpack.c.bf16 %v1015, %v1013
    %v1024 = vpack.c.bf16 %v1016, %v1014
    %v1025 = vld [vmem:[#allocation7] sm:$0xf]
    %v1026 = vld [vmem:[#allocation7 + $0x4] sm:$0xf]
    %v1027 = vld [vmem:[#allocation7 + $0x8] sm:$0xf]
    %v1028 = vld [vmem:[#allocation7 + $0xc] sm:$0xf]
    %v1029 = vld [vmem:[#allocation7 + $0x10] sm:$0xf]
    %v1030 = vld [vmem:[#allocation7 + $0x14] sm:$0xf]
    %v1031 = vld [vmem:[#allocation7 + $0x18] sm:$0xf]
    %v1032 = vld [vmem:[#allocation7 + $0x1c] sm:$0xf]
    %v1033 = vld [vmem:[#allocation7 + $0x20] sm:$0xf]
    %v1034 = vld [vmem:[#allocation7 + $0x24] sm:$0xf]
    %v1035 = vld [vmem:[#allocation7 + $0x28] sm:$0xf]
    %v1036 = vld [vmem:[#allocation7 + $0x2c] sm:$0xf]
    %v1037 = vld [vmem:[#allocation7 + $0x30] sm:$0xf]
    %v1038 = vld [vmem:[#allocation7 + $0x34] sm:$0xf]
    %v1039 = vld [vmem:[#allocation7 + $0x38] sm:$0xf]
    %v1040 = vld [vmem:[#allocation7 + $0x3c] sm:$0xf]
    %v1041 = vld [vmem:[#allocation7 + $0x40] sm:$0xf]
    %v1042 = vld [vmem:[#allocation7 + $0x44] sm:$0xf]
    %v1043 = vld [vmem:[#allocation7 + $0x48] sm:$0xf]
    %v1044 = vld [vmem:[#allocation7 + $0x4c] sm:$0xf]
    %v1045 = vld [vmem:[#allocation7 + $0x50] sm:$0xf]
    %v1046 = vld [vmem:[#allocation7 + $0x54] sm:$0xf]
    %v1047 = vld [vmem:[#allocation7 + $0x58] sm:$0xf]
    %v1048 = vld [vmem:[#allocation7 + $0x5c] sm:$0xf]
    %v1049 = vld [vmem:[#allocation7 + $0x60] sm:$0xf]
    %v1050 = vld [vmem:[#allocation7 + $0x64] sm:$0xf]
    %v1051 = vld [vmem:[#allocation7 + $0x68] sm:$0xf]
    %v1052 = vld [vmem:[#allocation7 + $0x6c] sm:$0xf]
    %v1053 = vld [vmem:[#allocation7 + $0x70] sm:$0xf]
    %v1054 = vld [vmem:[#allocation7 + $0x74] sm:$0xf]
    %v1055 = vld [vmem:[#allocation7 + $0x78] sm:$0xf]
    %v1056 = vld [vmem:[#allocation7 + $0x7c] sm:$0xf]
    %v1089 = vunpack.c.l.b16 %v1025
    %v1090 = vunpack.c.l.b16 %v1026
    %v1091 = vunpack.c.l.b16 %v1027
    %v1092 = vunpack.c.l.b16 %v1028
    %v1093 = vunpack.c.l.b16 %v1029
    %v1094 = vunpack.c.l.b16 %v1030
    %v1095 = vunpack.c.l.b16 %v1031
    %v1096 = vunpack.c.l.b16 %v1032
    %v1097 = vunpack.c.l.b16 %v1033
    %v1098 = vunpack.c.l.b16 %v1034
    %v1099 = vunpack.c.l.b16 %v1035
    %v1100 = vunpack.c.l.b16 %v1036
    %v1101 = vunpack.c.l.b16 %v1037
    %v1102 = vunpack.c.l.b16 %v1038
    %v1103 = vunpack.c.l.b16 %v1039
    %v1104 = vunpack.c.l.b16 %v1040
    %v1105 = vunpack.c.l.b16 %v1041
    %v1106 = vunpack.c.l.b16 %v1042
    %v1107 = vunpack.c.l.b16 %v1043
    %v1108 = vunpack.c.l.b16 %v1044
    %v1109 = vunpack.c.l.b16 %v1045
    %v1110 = vunpack.c.l.b16 %v1046
    %v1111 = vunpack.c.l.b16 %v1047
    %v1112 = vunpack.c.l.b16 %v1048
    %v1113 = vunpack.c.l.b16 %v1049
    %v1114 = vunpack.c.l.b16 %v1050
    %v1115 = vunpack.c.l.b16 %v1051
    %v1116 = vunpack.c.l.b16 %v1052
    %v1117 = vunpack.c.l.b16 %v1053
    %v1118 = vunpack.c.l.b16 %v1054
    %v1119 = vunpack.c.l.b16 %v1055
    %v1120 = vunpack.c.l.b16 %v1056
    %v1121 = vpack.c.b16 %v1090, %v1089
    %v1122 = vpack.c.b16 %v1092, %v1091
    %v1123 = vpack.c.b16 %v1094, %v1093
    %v1124 = vpack.c.b16 %v1096, %v1095
    %v1125 = vpack.c.b16 %v1098, %v1097
    %v1126 = vpack.c.b16 %v1100, %v1099
    %v1127 = vpack.c.b16 %v1102, %v1101
    %v1128 = vpack.c.b16 %v1104, %v1103
    %v1129 = vpack.c.b16 %v1106, %v1105
    %v1130 = vpack.c.b16 %v1108, %v1107
    %v1131 = vpack.c.b16 %v1110, %v1109
    %v1132 = vpack.c.b16 %v1112, %v1111
    %v1133 = vpack.c.b16 %v1114, %v1113
    %v1134 = vpack.c.b16 %v1116, %v1115
    %v1135 = vpack.c.b16 %v1118, %v1117
    %v1136 = vpack.c.b16 %v1120, %v1119
    %1153 = vmatprep.subr.bf16.mxu0 0
    %1154 = vmatpush1.bf16.msra.mxu0 %v1121
    %1155 = vmatprep.subr.bf16.mxu0 0
    %1156 = vmatpush1.bf16.msra.mxu0 %v1122
    %1157 = vmatprep.subr.bf16.mxu0 0
    %1158 = vmatpush1.bf16.msra.mxu0 %v1123
    %1159 = vmatprep.subr.bf16.mxu0 0
    %1160 = vmatpush1.bf16.msra.mxu0 %v1124
    %1161 = vmatprep.subr.bf16.mxu0 0
    %1162 = vmatpush1.bf16.msra.mxu0 %v1125
    %1163 = vmatprep.subr.bf16.mxu0 0
    %1164 = vmatpush1.bf16.msra.mxu0 %v1126
    %1165 = vmatprep.subr.bf16.mxu0 0
    %1166 = vmatpush1.bf16.msra.mxu0 %v1127
    %1167 = vmatprep.subr.bf16.mxu0 0
    %1168 = vmatpush1.bf16.msra.mxu0 %v1128
    %1169 = vmatprep.subr.bf16.mxu0 0
    %1170 = vmatpush1.bf16.msra.mxu0 %v1129
    %1171 = vmatprep.subr.bf16.mxu0 0
    %1172 = vmatpush1.bf16.msra.mxu0 %v1130
    %1173 = vmatprep.subr.bf16.mxu0 0
    %1174 = vmatpush1.bf16.msra.mxu0 %v1131
    %1175 = vmatprep.subr.bf16.mxu0 0
    %1176 = vmatpush1.bf16.msra.mxu0 %v1132
    %1177 = vmatprep.subr.bf16.mxu0 0
    %1178 = vmatpush1.bf16.msra.mxu0 %v1133
    %1179 = vmatprep.subr.bf16.mxu0 0
    %1180 = vmatpush1.bf16.msra.mxu0 %v1134
    %1181 = vmatprep.subr.bf16.mxu0 0
    %1182 = vmatpush1.bf16.msra.mxu0 %v1135
    %1183 = vmatprep.subr.bf16.mxu0 0
    %1184 = vmatpush1.bf16.msra.mxu0 %v1136
    %1185 = vmatprep.mubr.bf16.mxu0 %v1018
    %1186 = vmatmul.mubr.bf16.gmra.mrb[0].mxu0 %v1017
    %v1187 = vpop.f32.mrb[0].mxu0
    %v1188 = vadd.f32 0.0, %v1187
    %v1189 = vpop.f32.mrb[0].mxu0
    %v1190 = vpop.f32.mrb[0].mxu0
    %v1191 = vadd.f32 0.0, %v1190
    %v1192 = vpop.f32.mrb[0].mxu0
    %1193 = vmatprep.mubr.bf16.mxu0 %v1020
    %1194 = vmatmul.mubr.bf16.gmra.mrb[0].mxu0 %v1019
    %v1195 = vpop.f32.mrb[0].mxu0
    %v1196 = vadd.f32 0.0, %v1195
    %v1197 = vpop.f32.mrb[0].mxu0
    %v1198 = vpop.f32.mrb[0].mxu0
    %v1199 = vadd.f32 0.0, %v1198
    %v1200 = vpop.f32.mrb[0].mxu0
    %1201 = vmatprep.mubr.bf16.mxu0 %v1022
    %1202 = vmatmul.mubr.bf16.gmra.mrb[0].mxu0 %v1021
    %v1203 = vpop.f32.mrb[0].mxu0
    %v1204 = vadd.f32 0.0, %v1203
    %v1205 = vpop.f32.mrb[0].mxu0
    %v1206 = vpop.f32.mrb[0].mxu0
    %v1207 = vadd.f32 0.0, %v1206
    %v1208 = vpop.f32.mrb[0].mxu0
    %1209 = vmatprep.mubr.bf16.mxu0 %v1024
    %1210 = vmatmul.mubr.bf16.gmra.mrb[0].mxu0 %v1023
    %v1211 = vpop.f32.mrb[0].mxu0
    %v1212 = vadd.f32 0.0, %v1211
    %v1213 = vpop.f32.mrb[0].mxu0
    %v1214 = vpop.f32.mrb[0].mxu0
    %v1215 = vadd.f32 0.0, %v1214
    %v1216 = vpop.f32.mrb[0].mxu0
    %1217 = vdwg.mxu0
    %v1218 = vlaneseq
    %v1219 = vand.u32 %v1218, 127
    %vm1220 = vcmp.lt.s32.totalorder %v1219, 10
    %v1221 = vsel %vm1220, %v1188, -1e+30
    %v1222 = vsel %vm1220, %v1191, -1e+30
    %v1223 = vsel %vm1220, %v1196, -1e+30
    %v1224 = vsel %vm1220, %v1199, -1e+30
    %v1225 = vsel %vm1220, %v1204, -1e+30
    %v1226 = vsel %vm1220, %v1207, -1e+30
    %v1227 = vsel %vm1220, %v1212, -1e+30
    %v1228 = vsel %vm1220, %v1215, -1e+30
    %1229 = vmax.xlane.f32.xlu0 %v1221
    %v1230 = vpop.xlane.xlu0 %1229
    %1231 = vmax.xlane.f32.xlu0 %v1222
    %v1232 = vpop.xlane.xlu0 %1231
    %1233 = vmax.xlane.f32.xlu0 %v1223
    %v1234 = vpop.xlane.xlu0 %1233
    %1235 = vmax.xlane.f32.xlu0 %v1224
    %v1236 = vpop.xlane.xlu0 %1235
    %1237 = vmax.xlane.f32.xlu0 %v1225
    %v1238 = vpop.xlane.xlu0 %1237
    %1239 = vmax.xlane.f32.xlu0 %v1226
    %v1240 = vpop.xlane.xlu0 %1239
    %1241 = vmax.xlane.f32.xlu0 %v1227
    %v1242 = vpop.xlane.xlu0 %1241
    %1243 = vmax.xlane.f32.xlu0 %v1228
    %v1244 = vpop.xlane.xlu0 %1243
    %v1245 = vsub.f32 %v1221, %v1230
    %v1246 = vsub.f32 %v1222, %v1232
    %v1247 = vsub.f32 %v1223, %v1234
    %v1248 = vsub.f32 %v1224, %v1236
    %v1249 = vsub.f32 %v1225, %v1238
    %v1250 = vsub.f32 %v1226, %v1240
    %v1251 = vsub.f32 %v1227, %v1242
    %v1252 = vsub.f32 %v1228, %v1244
    %v1253 = vmul.f32 %v1245, 1.442695
    %v1254 = vpow.pop %v1253
    %v1255 = vmul.f32 %v1246, 1.442695
    %v1256 = vpow.pop %v1255
    %v1257 = vmul.f32 %v1247, 1.442695
    %v1258 = vpow.pop %v1257
    %v1259 = vmul.f32 %v1248, 1.442695
    %v1260 = vpow.pop %v1259
    %v1261 = vmul.f32 %v1249, 1.442695
    %v1262 = vpow.pop %v1261
    %v1263 = vmul.f32 %v1250, 1.442695
    %v1264 = vpow.pop %v1263
    %v1265 = vmul.f32 %v1251, 1.442695
    %v1266 = vpow.pop %v1265
    %v1267 = vmul.f32 %v1252, 1.442695
    %v1268 = vpow.pop %v1267
    %1269 = vadd.xlane.f32.xlu0 %v1254
    %v1270 = vpop.xlane.xlu0 %1269
    %1271 = vadd.xlane.f32.xlu0 %v1256
    %v1272 = vpop.xlane.xlu0 %1271
    %1273 = vadd.xlane.f32.xlu0 %v1258
    %v1274 = vpop.xlane.xlu0 %1273
    %1275 = vadd.xlane.f32.xlu0 %v1260
    %v1276 = vpop.xlane.xlu0 %1275
    %1277 = vadd.xlane.f32.xlu0 %v1262
    %v1278 = vpop.xlane.xlu0 %1277
    %1279 = vadd.xlane.f32.xlu0 %v1264
    %v1280 = vpop.xlane.xlu0 %1279
    %1281 = vadd.xlane.f32.xlu0 %v1266
    %v1282 = vpop.xlane.xlu0 %1281
    %1283 = vadd.xlane.f32.xlu0 %v1268
    %v1284 = vpop.xlane.xlu0 %1283
    %v1285 = vlog2.pop %v1270
    %v1286 = vmul.f32 %v1285, 0.6931472
    %v1287 = vlog2.pop %v1272
    %v1288 = vmul.f32 %v1287, 0.6931472
    %v1289 = vlog2.pop %v1274
    %v1290 = vmul.f32 %v1289, 0.6931472
    %v1291 = vlog2.pop %v1276
    %v1292 = vmul.f32 %v1291, 0.6931472
    %v1293 = vlog2.pop %v1278
    %v1294 = vmul.f32 %v1293, 0.6931472
    %v1295 = vlog2.pop %v1280
    %v1296 = vmul.f32 %v1295, 0.6931472
    %v1297 = vlog2.pop %v1282
    %v1298 = vmul.f32 %v1297, 0.6931472
    %v1299 = vlog2.pop %v1284
    %v1300 = vmul.f32 %v1299, 0.6931472
    %v1301 = vsub.f32 %v1245, %v1286
    %v1302 = vsub.f32 %v1246, %v1288
    %v1303 = vsub.f32 %v1247, %v1290
    %v1304 = vsub.f32 %v1248, %v1292
    %v1305 = vsub.f32 %v1249, %v1294
    %v1306 = vsub.f32 %v1250, %v1296
    %v1307 = vsub.f32 %v1251, %v1298
    %v1308 = vsub.f32 %v1252, %v1300
    %v1309 = vsel %vm1220, %v1301, 0.0
    %v1310 = vsel %vm1220, %v1302, 0.0
    %v1311 = vsel %vm1220, %v1303, 0.0
    %v1312 = vsel %vm1220, %v1304, 0.0
    %v1313 = vsel %vm1220, %v1305, 0.0
    %v1314 = vsel %vm1220, %v1306, 0.0
    %v1315 = vsel %vm1220, %v1307, 0.0
    %v1316 = vsel %vm1220, %v1308, 0.0
    %1317 = vst [vmem:[#allocation8] sm:$0xff] %v1309
    %1318 = vst [vmem:[#allocation8 + $0x8] sm:$0xff] %v1310
    %1319 = vst [vmem:[#allocation8 + $0x10] sm:$0xff] %v1311
    %1320 = vst [vmem:[#allocation8 + $0x18] sm:$0xff] %v1312
    %1321 = vst [vmem:[#allocation8 + $0x20] sm:$0xff] %v1313
    %1322 = vst [vmem:[#allocation8 + $0x28] sm:$0xff] %v1314
    %1323 = vst [vmem:[#allocation8 + $0x30] sm:$0xff] %v1315
    %1324 = vst [vmem:[#allocation8 + $0x38] sm:$0xff] %v1316
    // Predicated region
    $region30: #{tpu_custom_call.1} parent=1 // pred_check
      _
    $region31: #{tpu_custom_call.1} parent=1 // pred_check_branch
      %1326 = sbr.rel (0) target = $region33
    $region32: #{tpu_custom_call.1} parent=1 // pred_region
      %s1328 = ssub.s32 1024, 1024
      %1329 = vsyncadd [#allocation4], %s1328
      %s1330 = sshll.u32 [#allocation8], 4
      %s1331 = int_to_ptr.vmem [resolvable:$true] %s1330
      %1336 = dma.vmem_to_hbm [thread:$0]  %s1331, 1024, %s4, [#allocation4], 128, 128, 8
    $region33: #{tpu_custom_call.1} parent=1 // pred_fallthru
      _
    // Predicated region
    $region34: #{tpu_custom_call.1} parent=1 // pred_check
      _
    $region35: #{tpu_custom_call.1} parent=1 // pred_check_branch
      %1338 = sbr.rel (0) target = $region37
    $region36: #{tpu_custom_call.1} parent=1 // pred_region
      %1339 = dma.done [#allocation4], 1024
    $region37: #{tpu_custom_call.1} parent=1 // pred_fallthru
      _
    %1340 = vsyncpa [#allocation3], 1
    %1341 = vsyncpa [#allocation6], 1
    %1342 = vsyncpa [#allocation4], 1

</llo_original>
